<compile_context>
chip_gen: v5e
topology: v5e:2x2
jax: 0.10.0
libtpu: 0.0.40
codegen_flags: <defaults>
</compile_context>

<pallas_src>
import functools

import jax
import jax.numpy as jnp
import numpy as np
from jax import lax
from jax.experimental import pallas as pl
from jax.experimental.pallas import tpu as pltpu

LANE = 128  # lane-dense padded class dimension


def surname_kernel(tok_ref, len_ref, emb_ref, wih_ref, bih_ref, whh_ref, bhh_ref,
                   w1_ref, b1_ref, w2_ref, b2_ref, out_ref, *, T, B, apply_softmax):
    """Fused embedding + Elman RNN recurrence + final-state gather + MLP head.

    tok_ref: (T*B, 1) i32   time-major flattened token ids (row = t*B + b)
    len_ref: (B, 1)   i32   sequence lengths (final state picked at t == len-1)
    emb_ref: (V, E)   f32   embedding table (padding row already zeroed)
    wih_ref: (E, H), bih_ref: (1, H), whh_ref: (H, H), bhh_ref: (1, H)
    w1_ref:  (H, H),  b1_ref: (1, H)
    w2_ref:  (H, CP), b2_ref: (1, CP)   fc2 padded to lane-dense CP columns
    out_ref: (B, CP)  f32
    """
    V, _ = emb_ref.shape
    H = whh_ref.shape[0]

    # --- hoisted input projection for every timestep, fused with the embedding ---
    # one_hot(tokens) @ (emb @ W_ih) == emb[tokens] @ W_ih, as two batched matmuls.
    emb_wih = jnp.dot(emb_ref[...], wih_ref[...],
                      preferred_element_type=jnp.float32)            # (V, H)
    tok = tok_ref[...]                                                # (T*B, 1) i32
    onehot = (tok == lax.broadcasted_iota(jnp.int32, (T * B, V), 1)).astype(jnp.float32)
    bias = bih_ref[...] + bhh_ref[...]                                # (1, H)
    xproj = jnp.dot(onehot, emb_wih,
                    preferred_element_type=jnp.float32) + bias        # (T*B, H)

    whh = whh_ref[...]
    lens = len_ref[...]                                               # (B, 1)
    # column_gather picks t == len-1; len <= 0 behaves like PyTorch index -1
    # (last timestep), len > T is clamped to the last timestep.
    final_t = jnp.where(lens <= 0, T - 1, jnp.minimum(lens - 1, T - 1))

    # --- recurrence: only h @ W_hh remains on the serial chain; fully unrolled ---
    h = jnp.zeros((B, H), jnp.float32)
    fh = jnp.zeros((B, H), jnp.float32)
    for t in range(T):                                                # static T -> unrolled
        x_t = xproj[t * B:(t + 1) * B, :]                             # static slice
        h = jnp.tanh(jnp.dot(h, whh, preferred_element_type=jnp.float32) + x_t)
        fh = jnp.where(final_t == t, h, fh)

    # --- MLP head; F.dropout(0.5) -> identity (inference semantics) ---
    y = jnp.dot(fh, w1_ref[...], preferred_element_type=jnp.float32) + b1_ref[...]
    y = jnp.maximum(y, 0.0)                                           # ReLU
    y = jnp.dot(y, w2_ref[...], preferred_element_type=jnp.float32) + b2_ref[...]  # (B, CP)

    if apply_softmax:
        # padded columns carry a -1e30 bias: they never win the max and exp() -> 0,
        # so the softmax over the real C columns is exact.
        y = y - jnp.max(y, axis=1, keepdims=True)
        e = jnp.exp(y)
        y = e * pl.reciprocal(jnp.sum(e, axis=1, keepdims=True), approx=True)

    out_ref[...] = y


def surname_classifier_forward(params, x_in, x_lengths=None, apply_softmax=False):
    """JAX wrapper mirroring SurnameClassifier.forward (batch_first inputs)."""
    emb = params["emb"].astype(jnp.float32)
    H = params["w_hh"].shape[0]
    C = params["b2"].shape[-1]
    B, T = x_in.shape

    if x_lengths is None:
        x_lengths = jnp.full((B,), T, dtype=jnp.int32)   # == y_out[:, -1, :]
    lens2d = x_lengths.astype(jnp.int32).reshape(B, 1)

    # time-major flattened token ids -- only int32 indices cross HBM, never (B, T, E).
    tok_tm = jnp.transpose(x_in.astype(jnp.int32), (1, 0)).reshape(T * B, 1)

    # lane-dense fc2: zero-padded weight columns, -1e30 bias so padded logits are inert.
    w2p = jnp.zeros((H, LANE), jnp.float32).at[:, :C].set(params["w2"])
    b2p = jnp.full((1, LANE), -1e30, jnp.float32).at[:, :C].set(params["b2"])

    kernel = functools.partial(surname_kernel, T=T, B=B, apply_softmax=apply_softmax)
    out = pl.pallas_call(
        kernel,
        out_shape=jax.ShapeDtypeStruct((B, LANE), jnp.float32),
        in_specs=[pl.BlockSpec(memory_space=pltpu.MemorySpace.VMEM)] * 11,
        out_specs=pl.BlockSpec(memory_space=pltpu.MemorySpace.VMEM),
    )(tok_tm, lens2d, emb,
      params["w_ih"], params["b_ih"], params["w_hh"], params["b_hh"],
      params["w1"], params["b1"], w2p, b2p)
    return out[:, :C]


def init_params(key, num_embeddings, embedding_size, rnn_hidden_size, num_classes,
                padding_idx=0):
    """Deterministic parameter init matching the PyTorch module's shapes."""
    k = jax.random.split(key, 7)
    E, H, C = embedding_size, rnn_hidden_size, num_classes

    # nn.Embedding: N(0, 1), padding_idx row zeroed.
    emb = jax.random.normal(k[0], (num_embeddings, E), jnp.float32)
    emb = emb.at[padding_idx].set(0.0)

    # nn.RNNCell weights (stored transposed for x @ W): U(-1/sqrt(H), 1/sqrt(H)).
    s = 1.0 / jnp.sqrt(H)
    w_ih = jax.random.uniform(k[1], (E, H), jnp.float32, -s, s)
    b_ih = jax.random.uniform(k[2], (1, H), jnp.float32, -s, s)
    w_hh = jax.random.uniform(k[3], (H, H), jnp.float32, -s, s)
    b_hh = jax.random.uniform(k[4], (1, H), jnp.float32, -s, s)

    # nn.Linear: U(-1/sqrt(fan_in), 1/sqrt(fan_in)), stored transposed.
    s1 = 1.0 / jnp.sqrt(H)
    w1 = jax.random.uniform(k[5], (H, H), jnp.float32, -s1, s1)
    b1 = jnp.zeros((1, H), jnp.float32)
    w2 = jax.random.uniform(k[6], (H, C), jnp.float32, -s1, s1)
    b2 = jnp.zeros((1, C), jnp.float32)

    return dict(emb=emb, w_ih=w_ih, b_ih=b_ih, w_hh=w_hh, b_hh=b_hh,
                w1=w1, b1=b1, w2=w2, b2=b2)


def _ref_logits(params, x_in, x_lengths):
    """Pure-numpy (float64) reference of the forward pass (logits only)."""
    emb = np.asarray(params["emb"], np.float64)
    wih, bih = np.asarray(params["w_ih"], np.float64), np.asarray(params["b_ih"], np.float64)
    whh, bhh = np.asarray(params["w_hh"], np.float64), np.asarray(params["b_hh"], np.float64)
    w1, b1 = np.asarray(params["w1"], np.float64), np.asarray(params["b1"], np.float64)
    w2, b2 = np.asarray(params["w2"], np.float64), np.asarray(params["b2"], np.float64)
    x = np.asarray(x_in)
    lens = np.asarray(x_lengths)
    B, T = x.shape
    xe = emb[x]                                   # (B, T, E)
    h = np.zeros((B, whh.shape[0]))
    states = []
    for t in range(T):
        h = np.tanh(xe[:, t] @ wih + bih + h @ whh + bhh)
        states.append(h)
    states = np.stack(states, axis=1)             # (B, T, H)
    fh = states[np.arange(B), lens - 1]           # column_gather
    y = np.maximum(fh @ w1 + b1, 0.0)
    return y @ w2 + b2


if __name__ == "__main__":
    num_embeddings = 30      # character vocab
    embedding_size = 16
    rnn_hidden_size = 32
    num_classes = 8          # nationalities
    B, T = 4, 8              # batch, sequence length

    key = jax.random.PRNGKey(0)
    pkey, dkey = jax.random.split(key)
    params = init_params(pkey, num_embeddings, embedding_size,
                         rnn_hidden_size, num_classes)

    x_in = jax.random.randint(dkey, (B, T), 1, num_embeddings, dtype=jnp.int32)
    x_lengths = jnp.array([8, 5, 3, 7], dtype=jnp.int32)

    logits = surname_classifier_forward(params, x_in, x_lengths, apply_softmax=False)
    probs = surname_classifier_forward(params, x_in, x_lengths, apply_softmax=True)
    jax.block_until_ready((logits, probs))

    assert logits.shape == (B, num_classes)
    assert probs.shape == (B, num_classes)
    assert np.allclose(np.asarray(jnp.sum(probs, axis=1)), 1.0, atol=2e-3)
    ref = _ref_logits(params, x_in, x_lengths)
    assert np.allclose(np.asarray(logits), ref, atol=1e-3, rtol=1e-3)
    print("KERNEL_OK")
</pallas_src>

<mosaic_0001>
module attributes {stable_mosaic.version = 11 : i64} {
  func.func @surname_kernel(%arg0: memref<32x1xi32, #tpu.memory_space<vmem>>, %arg1: memref<4x1xi32, #tpu.memory_space<vmem>>, %arg2: memref<30x16xf32, #tpu.memory_space<vmem>>, %arg3: memref<16x32xf32, #tpu.memory_space<vmem>>, %arg4: memref<1x32xf32, #tpu.memory_space<vmem>>, %arg5: memref<32x32xf32, #tpu.memory_space<vmem>>, %arg6: memref<1x32xf32, #tpu.memory_space<vmem>>, %arg7: memref<32x32xf32, #tpu.memory_space<vmem>>, %arg8: memref<1x32xf32, #tpu.memory_space<vmem>>, %arg9: memref<32x128xf32, #tpu.memory_space<vmem>>, %arg10: memref<1x128xf32, #tpu.memory_space<vmem>>, %arg11: memref<4x128xf32, #tpu.memory_space<vmem>>) attributes {dimension_semantics = [], scalar_prefetch = 0 : i64, scratch_operands = 0 : i64, tpu.core_type = #tpu.core_type<tc>} {
    %c0 = arith.constant 0 : index
    %c0_0 = arith.constant 0 : index
    %0 = vector.load %arg2[%c0, %c0_0] : memref<30x16xf32, #tpu.memory_space<vmem>>, vector<30x16xf32>
    %c0_1 = arith.constant 0 : index
    %c0_2 = arith.constant 0 : index
    %1 = vector.load %arg3[%c0_1, %c0_2] : memref<16x32xf32, #tpu.memory_space<vmem>>, vector<16x32xf32>
    %cst = arith.constant dense<0.000000e+00> : vector<30x32xf32>
    %2 = tpu.matmul %0, %1, %cst {dimension_numbers = #tpu.dot_dimension_numbers<[1], [0], [0], [1], [0, 0, 1, 1], [], []>} : vector<30x16xf32>, vector<16x32xf32>, vector<30x32xf32> -> vector<30x32xf32>
    %c0_3 = arith.constant 0 : index
    %c0_4 = arith.constant 0 : index
    %3 = vector.load %arg0[%c0_3, %c0_4] : memref<32x1xi32, #tpu.memory_space<vmem>>, vector<32x1xi32>
    %4 = tpu.iota {dimensions = array<i32: 1>} : vector<32x30xi32>
    %5 = vector.broadcast %3 : vector<32x1xi32> to vector<32x30xi32>
    %6 = arith.cmpi eq, %5, %4 : vector<32x30xi32>
    %7 = arith.extui %6 : vector<32x30xi1> to vector<32x30xi32>
    %8 = arith.sitofp %7 : vector<32x30xi32> to vector<32x30xf32>
    %c0_5 = arith.constant 0 : index
    %c0_6 = arith.constant 0 : index
    %9 = vector.load %arg4[%c0_5, %c0_6] : memref<1x32xf32, #tpu.memory_space<vmem>>, vector<1x32xf32>
    %c0_7 = arith.constant 0 : index
    %c0_8 = arith.constant 0 : index
    %10 = vector.load %arg6[%c0_7, %c0_8] : memref<1x32xf32, #tpu.memory_space<vmem>>, vector<1x32xf32>
    %11 = arith.addf %9, %10 : vector<1x32xf32>
    %cst_9 = arith.constant dense<0.000000e+00> : vector<32x32xf32>
    %12 = tpu.matmul %8, %2, %cst_9 {dimension_numbers = #tpu.dot_dimension_numbers<[1], [0], [0], [1], [0, 0, 1, 1], [], []>} : vector<32x30xf32>, vector<30x32xf32>, vector<32x32xf32> -> vector<32x32xf32>
    %13 = vector.broadcast %11 : vector<1x32xf32> to vector<32x32xf32>
    %14 = arith.addf %12, %13 : vector<32x32xf32>
    %c0_10 = arith.constant 0 : index
    %c0_11 = arith.constant 0 : index
    %15 = vector.load %arg5[%c0_10, %c0_11] : memref<32x32xf32, #tpu.memory_space<vmem>>, vector<32x32xf32>
    %c0_12 = arith.constant 0 : index
    %c0_13 = arith.constant 0 : index
    %16 = vector.load %arg1[%c0_12, %c0_13] : memref<4x1xi32, #tpu.memory_space<vmem>>, vector<4x1xi32>
    %c0_i32 = arith.constant 0 : i32
    %17 = vector.broadcast %c0_i32 : i32 to vector<4x1xi32>
    %18 = arith.cmpi sle, %16, %17 : vector<4x1xi32>
    %c1_i32 = arith.constant 1 : i32
    %19 = vector.broadcast %c1_i32 : i32 to vector<4x1xi32>
    %20 = arith.subi %16, %19 : vector<4x1xi32>
    %c7_i32 = arith.constant 7 : i32
    %21 = vector.broadcast %c7_i32 : i32 to vector<4x1xi32>
    %22 = arith.minsi %20, %21 : vector<4x1xi32>
    %c7_i32_14 = arith.constant 7 : i32
    %23 = vector.broadcast %c7_i32_14 : i32 to vector<4x1xi32>
    %24 = arith.select %18, %23, %22 : vector<4x1xi1>, vector<4x1xi32>
    %cst_15 = arith.constant 0.000000e+00 : f32
    %25 = vector.broadcast %cst_15 : f32 to vector<4x32xf32>
    %cst_16 = arith.constant 0.000000e+00 : f32
    %26 = vector.broadcast %cst_16 : f32 to vector<4x32xf32>
    %27 = vector.extract_strided_slice %14 {offsets = [0, 0], sizes = [4, 32], strides = [1, 1]} : vector<32x32xf32> to vector<4x32xf32>
    %cst_17 = arith.constant dense<0.000000e+00> : vector<4x32xf32>
    %28 = tpu.matmul %25, %15, %cst_17 {dimension_numbers = #tpu.dot_dimension_numbers<[1], [0], [0], [1], [0, 0, 1, 1], [], []>} : vector<4x32xf32>, vector<32x32xf32>, vector<4x32xf32> -> vector<4x32xf32>
    %29 = arith.addf %28, %27 : vector<4x32xf32>
    %30 = math.tanh %29 : vector<4x32xf32>
    %c0_i32_18 = arith.constant 0 : i32
    %31 = vector.broadcast %c0_i32_18 : i32 to vector<4x1xi32>
    %32 = arith.cmpi eq, %24, %31 : vector<4x1xi32>
    %33 = vector.shape_cast %32 : vector<4x1xi1> to vector<4x1xi1>
    %34 = vector.broadcast %33 : vector<4x1xi1> to vector<4x32xi1>
    %35 = arith.select %34, %30, %26 : vector<4x32xi1>, vector<4x32xf32>
    %36 = vector.extract_strided_slice %14 {offsets = [4, 0], sizes = [4, 32], strides = [1, 1]} : vector<32x32xf32> to vector<4x32xf32>
    %cst_19 = arith.constant dense<0.000000e+00> : vector<4x32xf32>
    %37 = tpu.matmul %30, %15, %cst_19 {dimension_numbers = #tpu.dot_dimension_numbers<[1], [0], [0], [1], [0, 0, 1, 1], [], []>} : vector<4x32xf32>, vector<32x32xf32>, vector<4x32xf32> -> vector<4x32xf32>
    %38 = arith.addf %37, %36 : vector<4x32xf32>
    %39 = math.tanh %38 : vector<4x32xf32>
    %c1_i32_20 = arith.constant 1 : i32
    %40 = vector.broadcast %c1_i32_20 : i32 to vector<4x1xi32>
    %41 = arith.cmpi eq, %24, %40 : vector<4x1xi32>
    %42 = vector.shape_cast %41 : vector<4x1xi1> to vector<4x1xi1>
    %43 = vector.broadcast %42 : vector<4x1xi1> to vector<4x32xi1>
    %44 = arith.select %43, %39, %35 : vector<4x32xi1>, vector<4x32xf32>
    %45 = vector.extract_strided_slice %14 {offsets = [8, 0], sizes = [4, 32], strides = [1, 1]} : vector<32x32xf32> to vector<4x32xf32>
    %cst_21 = arith.constant dense<0.000000e+00> : vector<4x32xf32>
    %46 = tpu.matmul %39, %15, %cst_21 {dimension_numbers = #tpu.dot_dimension_numbers<[1], [0], [0], [1], [0, 0, 1, 1], [], []>} : vector<4x32xf32>, vector<32x32xf32>, vector<4x32xf32> -> vector<4x32xf32>
    %47 = arith.addf %46, %45 : vector<4x32xf32>
    %48 = math.tanh %47 : vector<4x32xf32>
    %c2_i32 = arith.constant 2 : i32
    %49 = vector.broadcast %c2_i32 : i32 to vector<4x1xi32>
    %50 = arith.cmpi eq, %24, %49 : vector<4x1xi32>
    %51 = vector.shape_cast %50 : vector<4x1xi1> to vector<4x1xi1>
    %52 = vector.broadcast %51 : vector<4x1xi1> to vector<4x32xi1>
    %53 = arith.select %52, %48, %44 : vector<4x32xi1>, vector<4x32xf32>
    %54 = vector.extract_strided_slice %14 {offsets = [12, 0], sizes = [4, 32], strides = [1, 1]} : vector<32x32xf32> to vector<4x32xf32>
    %cst_22 = arith.constant dense<0.000000e+00> : vector<4x32xf32>
    %55 = tpu.matmul %48, %15, %cst_22 {dimension_numbers = #tpu.dot_dimension_numbers<[1], [0], [0], [1], [0, 0, 1, 1], [], []>} : vector<4x32xf32>, vector<32x32xf32>, vector<4x32xf32> -> vector<4x32xf32>
    %56 = arith.addf %55, %54 : vector<4x32xf32>
    %57 = math.tanh %56 : vector<4x32xf32>
    %c3_i32 = arith.constant 3 : i32
    %58 = vector.broadcast %c3_i32 : i32 to vector<4x1xi32>
    %59 = arith.cmpi eq, %24, %58 : vector<4x1xi32>
    %60 = vector.shape_cast %59 : vector<4x1xi1> to vector<4x1xi1>
    %61 = vector.broadcast %60 : vector<4x1xi1> to vector<4x32xi1>
    %62 = arith.select %61, %57, %53 : vector<4x32xi1>, vector<4x32xf32>
    %63 = vector.extract_strided_slice %14 {offsets = [16, 0], sizes = [4, 32], strides = [1, 1]} : vector<32x32xf32> to vector<4x32xf32>
    %cst_23 = arith.constant dense<0.000000e+00> : vector<4x32xf32>
    %64 = tpu.matmul %57, %15, %cst_23 {dimension_numbers = #tpu.dot_dimension_numbers<[1], [0], [0], [1], [0, 0, 1, 1], [], []>} : vector<4x32xf32>, vector<32x32xf32>, vector<4x32xf32> -> vector<4x32xf32>
    %65 = arith.addf %64, %63 : vector<4x32xf32>
    %66 = math.tanh %65 : vector<4x32xf32>
    %c4_i32 = arith.constant 4 : i32
    %67 = vector.broadcast %c4_i32 : i32 to vector<4x1xi32>
    %68 = arith.cmpi eq, %24, %67 : vector<4x1xi32>
    %69 = vector.shape_cast %68 : vector<4x1xi1> to vector<4x1xi1>
    %70 = vector.broadcast %69 : vector<4x1xi1> to vector<4x32xi1>
    %71 = arith.select %70, %66, %62 : vector<4x32xi1>, vector<4x32xf32>
    %72 = vector.extract_strided_slice %14 {offsets = [20, 0], sizes = [4, 32], strides = [1, 1]} : vector<32x32xf32> to vector<4x32xf32>
    %cst_24 = arith.constant dense<0.000000e+00> : vector<4x32xf32>
    %73 = tpu.matmul %66, %15, %cst_24 {dimension_numbers = #tpu.dot_dimension_numbers<[1], [0], [0], [1], [0, 0, 1, 1], [], []>} : vector<4x32xf32>, vector<32x32xf32>, vector<4x32xf32> -> vector<4x32xf32>
    %74 = arith.addf %73, %72 : vector<4x32xf32>
    %75 = math.tanh %74 : vector<4x32xf32>
    %c5_i32 = arith.constant 5 : i32
    %76 = vector.broadcast %c5_i32 : i32 to vector<4x1xi32>
    %77 = arith.cmpi eq, %24, %76 : vector<4x1xi32>
    %78 = vector.shape_cast %77 : vector<4x1xi1> to vector<4x1xi1>
    %79 = vector.broadcast %78 : vector<4x1xi1> to vector<4x32xi1>
    %80 = arith.select %79, %75, %71 : vector<4x32xi1>, vector<4x32xf32>
    %81 = vector.extract_strided_slice %14 {offsets = [24, 0], sizes = [4, 32], strides = [1, 1]} : vector<32x32xf32> to vector<4x32xf32>
    %cst_25 = arith.constant dense<0.000000e+00> : vector<4x32xf32>
    %82 = tpu.matmul %75, %15, %cst_25 {dimension_numbers = #tpu.dot_dimension_numbers<[1], [0], [0], [1], [0, 0, 1, 1], [], []>} : vector<4x32xf32>, vector<32x32xf32>, vector<4x32xf32> -> vector<4x32xf32>
    %83 = arith.addf %82, %81 : vector<4x32xf32>
    %84 = math.tanh %83 : vector<4x32xf32>
    %c6_i32 = arith.constant 6 : i32
    %85 = vector.broadcast %c6_i32 : i32 to vector<4x1xi32>
    %86 = arith.cmpi eq, %24, %85 : vector<4x1xi32>
    %87 = vector.shape_cast %86 : vector<4x1xi1> to vector<4x1xi1>
    %88 = vector.broadcast %87 : vector<4x1xi1> to vector<4x32xi1>
    %89 = arith.select %88, %84, %80 : vector<4x32xi1>, vector<4x32xf32>
    %90 = vector.extract_strided_slice %14 {offsets = [28, 0], sizes = [4, 32], strides = [1, 1]} : vector<32x32xf32> to vector<4x32xf32>
    %cst_26 = arith.constant dense<0.000000e+00> : vector<4x32xf32>
    %91 = tpu.matmul %84, %15, %cst_26 {dimension_numbers = #tpu.dot_dimension_numbers<[1], [0], [0], [1], [0, 0, 1, 1], [], []>} : vector<4x32xf32>, vector<32x32xf32>, vector<4x32xf32> -> vector<4x32xf32>
    %92 = arith.addf %91, %90 : vector<4x32xf32>
    %93 = math.tanh %92 : vector<4x32xf32>
    %c7_i32_27 = arith.constant 7 : i32
    %94 = vector.broadcast %c7_i32_27 : i32 to vector<4x1xi32>
    %95 = arith.cmpi eq, %24, %94 : vector<4x1xi32>
    %96 = vector.shape_cast %95 : vector<4x1xi1> to vector<4x1xi1>
    %97 = vector.broadcast %96 : vector<4x1xi1> to vector<4x32xi1>
    %98 = arith.select %97, %93, %89 : vector<4x32xi1>, vector<4x32xf32>
    %c0_28 = arith.constant 0 : index
    %c0_29 = arith.constant 0 : index
    %99 = vector.load %arg7[%c0_28, %c0_29] : memref<32x32xf32, #tpu.memory_space<vmem>>, vector<32x32xf32>
    %cst_30 = arith.constant dense<0.000000e+00> : vector<4x32xf32>
    %100 = tpu.matmul %98, %99, %cst_30 {dimension_numbers = #tpu.dot_dimension_numbers<[1], [0], [0], [1], [0, 0, 1, 1], [], []>} : vector<4x32xf32>, vector<32x32xf32>, vector<4x32xf32> -> vector<4x32xf32>
    %c0_31 = arith.constant 0 : index
    %c0_32 = arith.constant 0 : index
    %101 = vector.load %arg8[%c0_31, %c0_32] : memref<1x32xf32, #tpu.memory_space<vmem>>, vector<1x32xf32>
    %102 = vector.broadcast %101 : vector<1x32xf32> to vector<4x32xf32>
    %103 = arith.addf %100, %102 : vector<4x32xf32>
    %cst_33 = arith.constant 0.000000e+00 : f32
    %104 = vector.broadcast %cst_33 : f32 to vector<4x32xf32>
    %105 = arith.maximumf %103, %104 : vector<4x32xf32>
    %c0_34 = arith.constant 0 : index
    %c0_35 = arith.constant 0 : index
    %106 = vector.load %arg9[%c0_34, %c0_35] : memref<32x128xf32, #tpu.memory_space<vmem>>, vector<32x128xf32>
    %cst_36 = arith.constant dense<0.000000e+00> : vector<4x128xf32>
    %107 = tpu.matmul %105, %106, %cst_36 {dimension_numbers = #tpu.dot_dimension_numbers<[1], [0], [0], [1], [0, 0, 1, 1], [], []>} : vector<4x32xf32>, vector<32x128xf32>, vector<4x128xf32> -> vector<4x128xf32>
    %c0_37 = arith.constant 0 : index
    %c0_38 = arith.constant 0 : index
    %108 = vector.load %arg10[%c0_37, %c0_38] : memref<1x128xf32, #tpu.memory_space<vmem>>, vector<1x128xf32>
    %109 = vector.broadcast %108 : vector<1x128xf32> to vector<4x128xf32>
    %110 = arith.addf %107, %109 : vector<4x128xf32>
    %c0_39 = arith.constant 0 : index
    %c0_40 = arith.constant 0 : index
    %111 = vector.load %arg11[%c0_39, %c0_40] : memref<4x128xf32, #tpu.memory_space<vmem>>, vector<4x128xf32>
    tpu.vector_store %arg11[%c0_39, %c0_40], %110 {strides = array<i32>} : memref<4x128xf32, #tpu.memory_space<vmem>>, vector<4x128xf32>,
    return
  }
}

</mosaic_0001>

<llo_original>
// kernel: tpu_custom_call.1
$region0: #{tpu_custom_call.1}
  #allocation0 [shape = 'u32[]', space=smem, size = 0x4, offset = 0x4, fixed_abs, tag = 'smem constant byte address 0x4 - core index']
  #allocation1 [shape = 'u32[72,128]{1,0:T(1,128)}', space=vmem, size = 0x9000, scoped, tag = 'internal scratch']
  %s0 = inlined_call_operand.vmem [shape: s32[32,1], index: 0, kind: input, shape index: {}]
  %s1 = inlined_call_operand.vmem [shape: s32[4,1], index: 1, kind: input, shape index: {}]
  %s2 = inlined_call_operand.vmem [shape: f32[30,16], index: 2, kind: input, shape index: {}]
  %s3 = inlined_call_operand.hbm [shape: f32[16,32], index: 3, kind: input, shape index: {}]
  %s4 = inlined_call_operand.vmem [shape: f32[1,32], index: 4, kind: input, shape index: {}]
  %s5 = inlined_call_operand.vmem [shape: f32[32,32], index: 5, kind: input, shape index: {}]
  %s6 = inlined_call_operand.vmem [shape: f32[1,32], index: 6, kind: input, shape index: {}]
  %s7 = inlined_call_operand.vmem [shape: f32[32,32], index: 7, kind: input, shape index: {}]
  %s8 = inlined_call_operand.vmem [shape: f32[1,32], index: 8, kind: input, shape index: {}]
  %s9 = inlined_call_operand.hbm [shape: f32[32,128], index: 9, kind: input, shape index: {}]
  %s10 = inlined_call_operand.vmem [shape: f32[1,128], index: 10, kind: input, shape index: {}]
  %s11 = inlined_call_operand.hbm [shape: f32[4,128], index: 11, kind: output, shape index: {}]
  %s12 = sld [smem:[#allocation0]]
  $region62: #{tpu_custom_call.1} parent=0
    _
  %s14 = ssub.s32 1, %s12
  %s15 = scalar_select 0, %s14, %s12
  $region1: #{tpu_custom_call.1} parent=0
    #allocation2 [shape = 'u8[8192]{0}', space=vmem, size = 0x2000, scoped, tag = 'input window, operand 3, single buffered']
    #allocation3 [shape = 's32[1]{0}', space=sflag, size = 0x4, scoped, tag = 'scoped memory for tpu_custom_call.1']
    #allocation4 [shape = 's32[1]{0}', space=sflag, size = 0x4, scoped, tag = 'scoped memory for tpu_custom_call.1']
    #allocation5 [shape = 'u8[16384]{0}', space=vmem, size = 0x4000, scoped, tag = 'input window, operand 9, single buffered']
    #allocation6 [shape = 's32[1]{0}', space=sflag, size = 0x4, scoped, tag = 'scoped memory for tpu_custom_call.1']
    #allocation7 [shape = 'u8[2048]{0}', space=vmem, size = 0x800, scoped, tag = 'output window, operand 0, single buffered']
    %16 = vsyncpa [#allocation3], 0
    %17 = vsyncpa [#allocation6], 0
    %18 = vsyncpa [#allocation4], 0
    // Predicated region
    $region2: #{tpu_custom_call.1} parent=1 // pred_check
      _
    $region3: #{tpu_custom_call.1} parent=1 // pred_check_branch
      %20 = sbr.rel (0) target = $region5
    $region4: #{tpu_custom_call.1} parent=1 // pred_region
      _
    $region5: #{tpu_custom_call.1} parent=1 // pred_fallthru
      _
    // Predicated region
    $region6: #{tpu_custom_call.1} parent=1 // pred_check
      _
    $region7: #{tpu_custom_call.1} parent=1 // pred_check_branch
      %22 = sbr.rel (0) target = $region9
    $region8: #{tpu_custom_call.1} parent=1 // pred_region
      _
    $region9: #{tpu_custom_call.1} parent=1 // pred_fallthru
      _
    // Predicated region
    $region10: #{tpu_custom_call.1} parent=1 // pred_check
      _
    $region11: #{tpu_custom_call.1} parent=1 // pred_check_branch
      %24 = sbr.rel (0) target = $region13
    $region12: #{tpu_custom_call.1} parent=1 // pred_region
      _
    $region13: #{tpu_custom_call.1} parent=1 // pred_fallthru
      _
    // Predicated region
    $region14: #{tpu_custom_call.1} parent=1 // pred_check
      _
    $region15: #{tpu_custom_call.1} parent=1 // pred_check_branch
      %26 = sbr.rel (0) target = $region17
    $region16: #{tpu_custom_call.1} parent=1 // pred_region
      %28 = vsyncadd [#allocation3], 0
      %s29 = sshll.u32 %s3, 4
      %s30 = int_to_ptr.hbm [resolvable:$true] %s29
      %s31 = sshll.u32 [#allocation2], 4
      %s32 = int_to_ptr.vmem [resolvable:$true] %s31
      %37 = dma.hbm_to_vmem [thread:$0]  %s30, 256, %s32, [#allocation3], 128, 128, 8
    $region17: #{tpu_custom_call.1} parent=1 // pred_fallthru
      _
    // Predicated region
    $region18: #{tpu_custom_call.1} parent=1 // pred_check
      _
    $region19: #{tpu_custom_call.1} parent=1 // pred_check_branch
      %39 = sbr.rel (0) target = $region21
    $region20: #{tpu_custom_call.1} parent=1 // pred_region
      _
    $region21: #{tpu_custom_call.1} parent=1 // pred_fallthru
      _
    // Predicated region
    $region22: #{tpu_custom_call.1} parent=1 // pred_check
      _
    $region23: #{tpu_custom_call.1} parent=1 // pred_check_branch
      %41 = sbr.rel (0) target = $region25
    $region24: #{tpu_custom_call.1} parent=1 // pred_region
      _
    $region25: #{tpu_custom_call.1} parent=1 // pred_fallthru
      _
    // Predicated region
    $region26: #{tpu_custom_call.1} parent=1 // pred_check
      _
    $region27: #{tpu_custom_call.1} parent=1 // pred_check_branch
      %43 = sbr.rel (0) target = $region29
    $region28: #{tpu_custom_call.1} parent=1 // pred_region
      _
    $region29: #{tpu_custom_call.1} parent=1 // pred_fallthru
      _
    // Predicated region
    $region30: #{tpu_custom_call.1} parent=1 // pred_check
      _
    $region31: #{tpu_custom_call.1} parent=1 // pred_check_branch
      %45 = sbr.rel (0) target = $region33
    $region32: #{tpu_custom_call.1} parent=1 // pred_region
      _
    $region33: #{tpu_custom_call.1} parent=1 // pred_fallthru
      _
    // Predicated region
    $region34: #{tpu_custom_call.1} parent=1 // pred_check
      _
    $region35: #{tpu_custom_call.1} parent=1 // pred_check_branch
      %47 = sbr.rel (0) target = $region37
    $region36: #{tpu_custom_call.1} parent=1 // pred_region
      _
    $region37: #{tpu_custom_call.1} parent=1 // pred_fallthru
      _
    // Predicated region
    $region38: #{tpu_custom_call.1} parent=1 // pred_check
      _
    $region39: #{tpu_custom_call.1} parent=1 // pred_check_branch
      %49 = sbr.rel (0) target = $region41
    $region40: #{tpu_custom_call.1} parent=1 // pred_region
      %51 = vsyncadd [#allocation6], 0
      %s52 = sshll.u32 %s9, 4
      %s53 = int_to_ptr.hbm [resolvable:$true] %s52
      %s54 = sshll.u32 [#allocation5], 4
      %s55 = int_to_ptr.vmem [resolvable:$true] %s54
      %60 = dma.hbm_to_vmem [thread:$0]  %s53, 512, %s55, [#allocation6], 128, 128, 8
    $region41: #{tpu_custom_call.1} parent=1 // pred_fallthru
      _
    // Predicated region
    $region42: #{tpu_custom_call.1} parent=1 // pred_check
      _
    $region43: #{tpu_custom_call.1} parent=1 // pred_check_branch
      %62 = sbr.rel (0) target = $region45
    $region44: #{tpu_custom_call.1} parent=1 // pred_region
      _
    $region45: #{tpu_custom_call.1} parent=1 // pred_fallthru
      _
    // Predicated region
    $region46: #{tpu_custom_call.1} parent=1 // pred_check
      _
    $region47: #{tpu_custom_call.1} parent=1 // pred_check_branch
      %64 = sbr.rel (0) target = $region49
    $region48: #{tpu_custom_call.1} parent=1 // pred_region
      %66 = dma.done [#allocation3], 256
    $region49: #{tpu_custom_call.1} parent=1 // pred_fallthru
      _
    // Predicated region
    $region50: #{tpu_custom_call.1} parent=1 // pred_check
      _
    $region51: #{tpu_custom_call.1} parent=1 // pred_check_branch
      %68 = sbr.rel (0) target = $region53
    $region52: #{tpu_custom_call.1} parent=1 // pred_region
      %70 = dma.done [#allocation6], 512
    $region53: #{tpu_custom_call.1} parent=1 // pred_fallthru
      _
    %v71 = vld [vmem:[%s2] sm:$0xff]
    %v72 = vld [vmem:[%s2 + $0x8] sm:$0xff]
    %v73 = vld [vmem:[%s2 + $0x10] sm:$0xff]
    %v74 = vld [vmem:[%s2 + $0x18] sm:$0x3f]
    %v75 = vld [vmem:[#allocation2] sm:$0xff]
    %v76 = vld [vmem:[#allocation2 + $0x8] sm:$0xff]
    %vm77 = vcmask 130048
    %v79 = vsel %vm77, %v71, 0
    %v82 = vsel %vm77, %v72, 0
    %v85 = vsel %vm77, %v73, 0
    %v88 = vsel %vm77, %v74, 0
    %90 = vmatpush.msra.mxu0 0.0
    %91 = vmatpush.msra.mxu0 0.0
    %92 = vmatpush.msra.mxu0 0.0
    %93 = vmatpush.msra.mxu0 0.0
    %94 = vmatpush.msra.mxu0 0.0
    %95 = vmatpush.msra.mxu0 0.0
    %96 = vmatpush.msra.mxu0 0.0
    %97 = vmatpush.msra.mxu0 0.0
    %98 = vmatpush.msra.mxu0 0.0
    %99 = vmatpush.msra.mxu0 0.0
    %100 = vmatpush.msra.mxu0 0.0
    %101 = vmatpush.msra.mxu0 0.0
    %102 = vmatpush.msra.mxu0 0.0
    %103 = vmatpush.msra.mxu0 0.0
    %104 = vmatpush.msra.mxu0 %v76
    %105 = vmatpush.msra.mxu0 %v75
    %106 = vmatmul.f32.gmra.mxu0 %v79
    %v107 = vpop.f32.mrf.mxu0
    %v108 = vadd.f32 0.0, %v107
    %109 = vmatmul.f32.gmra.mxu0 %v82
    %v110 = vpop.f32.mrf.mxu0
    %v111 = vadd.f32 0.0, %v110
    %112 = vmatmul.f32.gmra.mxu0 %v85
    %v113 = vpop.f32.mrf.mxu0
    %v114 = vadd.f32 0.0, %v113
    %115 = vmatmul.f32.gmra.mxu0 %v88
    %v116 = vpop.f32.mrf.mxu0
    %v117 = vadd.f32 0.0, %v116
    %118 = vdwg.mxu0
    %v119 = vld [vmem:[%s0] sm:$0xff]
    %v120 = vld [vmem:[%s0 + $0x8] sm:$0xff]
    %v121 = vld [vmem:[%s0 + $0x10] sm:$0xff]
    %v122 = vld [vmem:[%s0 + $0x18] sm:$0xff]
    %v123 = vlaneseq
    %v124 = vand.u32 %v123, 127
    %125 = vset.pattern.permute.xlu0 0
    %126 = vperm.xlu0 %125, %v119
    %v127 = vpop.permute.xlu0 %126
    %128 = vset.pattern.permute.xlu0 0
    %129 = vperm.xlu0 %128, %v120
    %v130 = vpop.permute.xlu0 %129
    %131 = vset.pattern.permute.xlu0 0
    %132 = vperm.xlu0 %131, %v121
    %v133 = vpop.permute.xlu0 %132
    %134 = vset.pattern.permute.xlu0 0
    %135 = vperm.xlu0 %134, %v122
    %v136 = vpop.permute.xlu0 %135
    %vm137 = vcmp.eq.s32.totalorder %v127, %v124
    %vm138 = vcmp.eq.s32.totalorder %v130, %v124
    %vm139 = vcmp.eq.s32.totalorder %v133, %v124
    %vm140 = vcmp.eq.s32.totalorder %v136, %v124
    %v141 = vsel %vm137, 1, 0
    %v142 = vsel %vm138, 1, 0
    %v143 = vsel %vm139, 1, 0
    %v144 = vsel %vm140, 1, 0
    %v145 = vcvt.s32.f32 %v141
    %v146 = vcvt.s32.f32 %v142
    %v147 = vcvt.s32.f32 %v143
    %v148 = vcvt.s32.f32 %v144
    %v149 = vld [vmem:[%s4] sm:$0x1]
    %v150 = vld [vmem:[%s6] sm:$0x1]
    %v151 = vadd.f32 %v149, %v150
    %v153 = vperm.slane %v151, 0
    %vm155 = vcmask 244736
    %v157 = vsel %vm155, %v145, 0
    %v160 = vsel %vm155, %v146, 0
    %v163 = vsel %vm155, %v147, 0
    %v166 = vsel %vm155, %v148, 0
    %vm168 = vcmask 1045504
    %v170 = vsel %vm168, %v117, 0
    %172 = vmatpush.msra.mxu0 0.0
    %173 = vmatpush.msra.mxu0 0.0
    %174 = vmatpush.msra.mxu0 0.0
    %175 = vmatpush.msra.mxu0 0.0
    %176 = vmatpush.msra.mxu0 0.0
    %177 = vmatpush.msra.mxu0 0.0
    %178 = vmatpush.msra.mxu0 0.0
    %179 = vmatpush.msra.mxu0 0.0
    %180 = vmatpush.msra.mxu0 0.0
    %181 = vmatpush.msra.mxu0 0.0
    %182 = vmatpush.msra.mxu0 0.0
    %183 = vmatpush.msra.mxu0 0.0
    %184 = vmatpush.msra.mxu0 %v170
    %185 = vmatpush.msra.mxu0 %v114
    %186 = vmatpush.msra.mxu0 %v111
    %187 = vmatpush.msra.mxu0 %v108
    %188 = vmatmul.f32.gmra.mxu0 %v157
    %v189 = vpop.f32.mrf.mxu0
    %v190 = vadd.f32 %v153, %v189
    %191 = vmatmul.f32.gmra.mxu0 %v160
    %v192 = vpop.f32.mrf.mxu0
    %v193 = vadd.f32 %v153, %v192
    %194 = vmatmul.f32.gmra.mxu0 %v163
    %v195 = vpop.f32.mrf.mxu0
    %v196 = vadd.f32 %v153, %v195
    %197 = vmatmul.f32.gmra.mxu0 %v166
    %v198 = vpop.f32.mrf.mxu0
    %v199 = vadd.f32 %v153, %v198
    %200 = vdwg.mxu0
    %v201 = vld [vmem:[%s5] sm:$0xff]
    %v202 = vld [vmem:[%s5 + $0x8] sm:$0xff]
    %v203 = vld [vmem:[%s5 + $0x10] sm:$0xff]
    %v204 = vld [vmem:[%s5 + $0x18] sm:$0xff]
    %v205 = vld [vmem:[%s1] sm:$0xf]
    %vm206 = vcmp.le.s32.totalorder %v205, 0
    %v207 = vsub.s32 %v205, 1
    %vm208 = vcmp.lt.s32.totalorder %v207, 7
    %v209 = vsel %vm208, %v207, 7
    %v210 = vsel %vm206, 7, %v209
    %vm211 = vcmask 261120
    %v213 = vsel %vm211, 0.0, 0
    %215 = vmatpush.msra.mxu0 0.0
    %216 = vmatpush.msra.mxu0 0.0
    %217 = vmatpush.msra.mxu0 0.0
    %218 = vmatpush.msra.mxu0 0.0
    %219 = vmatpush.msra.mxu0 0.0
    %220 = vmatpush.msra.mxu0 0.0
    %221 = vmatpush.msra.mxu0 0.0
    %222 = vmatpush.msra.mxu0 0.0
    %223 = vmatpush.msra.mxu0 0.0
    %224 = vmatpush.msra.mxu0 0.0
    %225 = vmatpush.msra.mxu0 0.0
    %226 = vmatpush.msra.mxu0 0.0
    %227 = vmatpush.msra.mxu0 %v204
    %228 = vmatpush.msra.mxu0 %v203
    %229 = vmatpush.msra.mxu0 %v202
    %230 = vmatpush.msra.mxu0 %v201
    %231 = vmatmul.f32.gmra.mxu0 %v213
    %v232 = vpop.f32.mrf.mxu0
    %v233 = vadd.f32 %v190, %v232
    %234 = vdwg.mxu0
    %v235 = vtanh.pop %v233
    %vm236 = vcmp.eq.s32.totalorder %v210, 0
    %v237 = vsel %vm236, 1, 0
    %238 = vset.pattern.permute.xlu0 0
    %239 = vperm.xlu0 %238, %v237
    %v240 = vpop.permute.xlu0 %239
    %vm241 = vcmp.eq.s32.totalorder %v240, 1
    %v242 = vsel %vm241, %v235, 0.0
    %v244 = vrot.slane %v190, 4
    %v247 = vsel %vm211, %v235, 0
    %249 = vmatpush.msra.mxu0 0.0
    %250 = vmatpush.msra.mxu0 0.0
    %251 = vmatpush.msra.mxu0 0.0
    %252 = vmatpush.msra.mxu0 0.0
    %253 = vmatpush.msra.mxu0 0.0
    %254 = vmatpush.msra.mxu0 0.0
    %255 = vmatpush.msra.mxu0 0.0
    %256 = vmatpush.msra.mxu0 0.0
    %257 = vmatpush.msra.mxu0 0.0
    %258 = vmatpush.msra.mxu0 0.0
    %259 = vmatpush.msra.mxu0 0.0
    %260 = vmatpush.msra.mxu0 0.0
    %261 = vmatpush.msra.mxu0 %v204
    %262 = vmatpush.msra.mxu0 %v203
    %263 = vmatpush.msra.mxu0 %v202
    %264 = vmatpush.msra.mxu0 %v201
    %265 = vmatmul.f32.gmra.mxu0 %v247
    %v266 = vpop.f32.mrf.mxu0
    %v267 = vadd.f32 %v244, %v266
    %268 = vdwg.mxu0
    %v269 = vtanh.pop %v267
    %vm270 = vcmp.eq.s32.totalorder %v210, 1
    %v271 = vsel %vm270, 1, 0
    %272 = vset.pattern.permute.xlu0 0
    %273 = vperm.xlu0 %272, %v271
    %v274 = vpop.permute.xlu0 %273
    %vm275 = vcmp.eq.s32.totalorder %v274, 1
    %v276 = vsel %vm275, %v269, %v242
    %v278 = vsel %vm211, %v269, 0
    %280 = vmatpush.msra.mxu0 0.0
    %281 = vmatpush.msra.mxu0 0.0
    %282 = vmatpush.msra.mxu0 0.0
    %283 = vmatpush.msra.mxu0 0.0
    %284 = vmatpush.msra.mxu0 0.0
    %285 = vmatpush.msra.mxu0 0.0
    %286 = vmatpush.msra.mxu0 0.0
    %287 = vmatpush.msra.mxu0 0.0
    %288 = vmatpush.msra.mxu0 0.0
    %289 = vmatpush.msra.mxu0 0.0
    %290 = vmatpush.msra.mxu0 0.0
    %291 = vmatpush.msra.mxu0 0.0
    %292 = vmatpush.msra.mxu0 %v204
    %293 = vmatpush.msra.mxu0 %v203
    %294 = vmatpush.msra.mxu0 %v202
    %295 = vmatpush.msra.mxu0 %v201
    %296 = vmatmul.f32.gmra.mxu0 %v278
    %v297 = vpop.f32.mrf.mxu0
    %v298 = vadd.f32 %v193, %v297
    %299 = vdwg.mxu0
    %v300 = vtanh.pop %v298
    %vm301 = vcmp.eq.s32.totalorder %v210, 2
    %v302 = vsel %vm301, 1, 0
    %303 = vset.pattern.permute.xlu0 0
    %304 = vperm.xlu0 %303, %v302
    %v305 = vpop.permute.xlu0 %304
    %vm306 = vcmp.eq.s32.totalorder %v305, 1
    %v307 = vsel %vm306, %v300, %v276
    %v309 = vrot.slane %v193, 4
    %v312 = vsel %vm211, %v300, 0
    %314 = vmatpush.msra.mxu0 0.0
    %315 = vmatpush.msra.mxu0 0.0
    %316 = vmatpush.msra.mxu0 0.0
    %317 = vmatpush.msra.mxu0 0.0
    %318 = vmatpush.msra.mxu0 0.0
    %319 = vmatpush.msra.mxu0 0.0
    %320 = vmatpush.msra.mxu0 0.0
    %321 = vmatpush.msra.mxu0 0.0
    %322 = vmatpush.msra.mxu0 0.0
    %323 = vmatpush.msra.mxu0 0.0
    %324 = vmatpush.msra.mxu0 0.0
    %325 = vmatpush.msra.mxu0 0.0
    %326 = vmatpush.msra.mxu0 %v204
    %327 = vmatpush.msra.mxu0 %v203
    %328 = vmatpush.msra.mxu0 %v202
    %329 = vmatpush.msra.mxu0 %v201
    %330 = vmatmul.f32.gmra.mxu0 %v312
    %v331 = vpop.f32.mrf.mxu0
    %v332 = vadd.f32 %v309, %v331
    %333 = vdwg.mxu0
    %v334 = vtanh.pop %v332
    %vm335 = vcmp.eq.s32.totalorder %v210, 3
    %v336 = vsel %vm335, 1, 0
    %337 = vset.pattern.permute.xlu0 0
    %338 = vperm.xlu0 %337, %v336
    %v339 = vpop.permute.xlu0 %338
    %vm340 = vcmp.eq.s32.totalorder %v339, 1
    %v341 = vsel %vm340, %v334, %v307
    %v343 = vsel %vm211, %v334, 0
    %345 = vmatpush.msra.mxu0 0.0
    %346 = vmatpush.msra.mxu0 0.0
    %347 = vmatpush.msra.mxu0 0.0
    %348 = vmatpush.msra.mxu0 0.0
    %349 = vmatpush.msra.mxu0 0.0
    %350 = vmatpush.msra.mxu0 0.0
    %351 = vmatpush.msra.mxu0 0.0
    %352 = vmatpush.msra.mxu0 0.0
    %353 = vmatpush.msra.mxu0 0.0
    %354 = vmatpush.msra.mxu0 0.0
    %355 = vmatpush.msra.mxu0 0.0
    %356 = vmatpush.msra.mxu0 0.0
    %357 = vmatpush.msra.mxu0 %v204
    %358 = vmatpush.msra.mxu0 %v203
    %359 = vmatpush.msra.mxu0 %v202
    %360 = vmatpush.msra.mxu0 %v201
    %361 = vmatmul.f32.gmra.mxu0 %v343
    %v362 = vpop.f32.mrf.mxu0
    %v363 = vadd.f32 %v196, %v362
    %364 = vdwg.mxu0
    %v365 = vtanh.pop %v363
    %vm366 = vcmp.eq.s32.totalorder %v210, 4
    %v367 = vsel %vm366, 1, 0
    %368 = vset.pattern.permute.xlu0 0
    %369 = vperm.xlu0 %368, %v367
    %v370 = vpop.permute.xlu0 %369
    %vm371 = vcmp.eq.s32.totalorder %v370, 1
    %v372 = vsel %vm371, %v365, %v341
    %v374 = vrot.slane %v196, 4
    %v377 = vsel %vm211, %v365, 0
    %379 = vmatpush.msra.mxu0 0.0
    %380 = vmatpush.msra.mxu0 0.0
    %381 = vmatpush.msra.mxu0 0.0
    %382 = vmatpush.msra.mxu0 0.0
    %383 = vmatpush.msra.mxu0 0.0
    %384 = vmatpush.msra.mxu0 0.0
    %385 = vmatpush.msra.mxu0 0.0
    %386 = vmatpush.msra.mxu0 0.0
    %387 = vmatpush.msra.mxu0 0.0
    %388 = vmatpush.msra.mxu0 0.0
    %389 = vmatpush.msra.mxu0 0.0
    %390 = vmatpush.msra.mxu0 0.0
    %391 = vmatpush.msra.mxu0 %v204
    %392 = vmatpush.msra.mxu0 %v203
    %393 = vmatpush.msra.mxu0 %v202
    %394 = vmatpush.msra.mxu0 %v201
    %395 = vmatmul.f32.gmra.mxu0 %v377
    %v396 = vpop.f32.mrf.mxu0
    %v397 = vadd.f32 %v374, %v396
    %398 = vdwg.mxu0
    %v399 = vtanh.pop %v397
    %vm400 = vcmp.eq.s32.totalorder %v210, 5
    %v401 = vsel %vm400, 1, 0
    %402 = vset.pattern.permute.xlu0 0
    %403 = vperm.xlu0 %402, %v401
    %v404 = vpop.permute.xlu0 %403
    %vm405 = vcmp.eq.s32.totalorder %v404, 1
    %v406 = vsel %vm405, %v399, %v372
    %v408 = vsel %vm211, %v399, 0
    %410 = vmatpush.msra.mxu0 0.0
    %411 = vmatpush.msra.mxu0 0.0
    %412 = vmatpush.msra.mxu0 0.0
    %413 = vmatpush.msra.mxu0 0.0
    %414 = vmatpush.msra.mxu0 0.0
    %415 = vmatpush.msra.mxu0 0.0
    %416 = vmatpush.msra.mxu0 0.0
    %417 = vmatpush.msra.mxu0 0.0
    %418 = vmatpush.msra.mxu0 0.0
    %419 = vmatpush.msra.mxu0 0.0
    %420 = vmatpush.msra.mxu0 0.0
    %421 = vmatpush.msra.mxu0 0.0
    %422 = vmatpush.msra.mxu0 %v204
    %423 = vmatpush.msra.mxu0 %v203
    %424 = vmatpush.msra.mxu0 %v202
    %425 = vmatpush.msra.mxu0 %v201
    %426 = vmatmul.f32.gmra.mxu0 %v408
    %v427 = vpop.f32.mrf.mxu0
    %v428 = vadd.f32 %v199, %v427
    %429 = vdwg.mxu0
    %v430 = vtanh.pop %v428
    %vm431 = vcmp.eq.s32.totalorder %v210, 6
    %v432 = vsel %vm431, 1, 0
    %433 = vset.pattern.permute.xlu0 0
    %434 = vperm.xlu0 %433, %v432
    %v435 = vpop.permute.xlu0 %434
    %vm436 = vcmp.eq.s32.totalorder %v435, 1
    %v437 = vsel %vm436, %v430, %v406
    %v439 = vrot.slane %v199, 4
    %v442 = vsel %vm211, %v430, 0
    %444 = vmatpush.msra.mxu0 0.0
    %445 = vmatpush.msra.mxu0 0.0
    %446 = vmatpush.msra.mxu0 0.0
    %447 = vmatpush.msra.mxu0 0.0
    %448 = vmatpush.msra.mxu0 0.0
    %449 = vmatpush.msra.mxu0 0.0
    %450 = vmatpush.msra.mxu0 0.0
    %451 = vmatpush.msra.mxu0 0.0
    %452 = vmatpush.msra.mxu0 0.0
    %453 = vmatpush.msra.mxu0 0.0
    %454 = vmatpush.msra.mxu0 0.0
    %455 = vmatpush.msra.mxu0 0.0
    %456 = vmatpush.msra.mxu0 %v204
    %457 = vmatpush.msra.mxu0 %v203
    %458 = vmatpush.msra.mxu0 %v202
    %459 = vmatpush.msra.mxu0 %v201
    %460 = vmatmul.f32.gmra.mxu0 %v442
    %v461 = vpop.f32.mrf.mxu0
    %v462 = vadd.f32 %v439, %v461
    %463 = vdwg.mxu0
    %v464 = vtanh.pop %v462
    %vm465 = vcmp.eq.s32.totalorder %v210, 7
    %v466 = vsel %vm465, 1, 0
    %467 = vset.pattern.permute.xlu0 0
    %468 = vperm.xlu0 %467, %v466
    %v469 = vpop.permute.xlu0 %468
    %vm470 = vcmp.eq.s32.totalorder %v469, 1
    %v471 = vsel %vm470, %v464, %v437
    %v472 = vld [vmem:[%s7] sm:$0xff]
    %v473 = vld [vmem:[%s7 + $0x8] sm:$0xff]
    %v474 = vld [vmem:[%s7 + $0x10] sm:$0xff]
    %v475 = vld [vmem:[%s7 + $0x18] sm:$0xff]
    %v476 = vld [vmem:[%s8] sm:$0x1]
    %v478 = vperm.slane %v476, 0
    %v481 = vsel %vm211, %v471, 0
    %483 = vmatpush.msra.mxu0 0.0
    %484 = vmatpush.msra.mxu0 0.0
    %485 = vmatpush.msra.mxu0 0.0
    %486 = vmatpush.msra.mxu0 0.0
    %487 = vmatpush.msra.mxu0 0.0
    %488 = vmatpush.msra.mxu0 0.0
    %489 = vmatpush.msra.mxu0 0.0
    %490 = vmatpush.msra.mxu0 0.0
    %491 = vmatpush.msra.mxu0 0.0
    %492 = vmatpush.msra.mxu0 0.0
    %493 = vmatpush.msra.mxu0 0.0
    %494 = vmatpush.msra.mxu0 0.0
    %495 = vmatpush.msra.mxu0 %v475
    %496 = vmatpush.msra.mxu0 %v474
    %497 = vmatpush.msra.mxu0 %v473
    %498 = vmatpush.msra.mxu0 %v472
    %499 = vmatmul.f32.gmra.mxu0 %v481
    %v500 = vpop.f32.mrf.mxu0
    %v501 = vadd.f32 %v478, %v500
    %502 = vdwg.mxu0
    %v503 = vmax.f32 %v501, 0.0
    %v504 = vld [vmem:[#allocation5] sm:$0xff]
    %v505 = vld [vmem:[#allocation5 + $0x8] sm:$0xff]
    %v506 = vld [vmem:[#allocation5 + $0x10] sm:$0xff]
    %v507 = vld [vmem:[#allocation5 + $0x18] sm:$0xff]
    %v508 = vld [vmem:[%s10] sm:$0x1]
    %v510 = vperm.slane %v508, 0
    %v513 = vsel %vm211, %v503, 0
    %515 = vmatpush.msra.mxu0 0.0
    %516 = vmatpush.msra.mxu0 0.0
    %517 = vmatpush.msra.mxu0 0.0
    %518 = vmatpush.msra.mxu0 0.0
    %519 = vmatpush.msra.mxu0 0.0
    %520 = vmatpush.msra.mxu0 0.0
    %521 = vmatpush.msra.mxu0 0.0
    %522 = vmatpush.msra.mxu0 0.0
    %523 = vmatpush.msra.mxu0 0.0
    %524 = vmatpush.msra.mxu0 0.0
    %525 = vmatpush.msra.mxu0 0.0
    %526 = vmatpush.msra.mxu0 0.0
    %527 = vmatpush.msra.mxu0 %v507
    %528 = vmatpush.msra.mxu0 %v506
    %529 = vmatpush.msra.mxu0 %v505
    %530 = vmatpush.msra.mxu0 %v504
    %531 = vmatmul.f32.gmra.mxu0 %v513
    %v532 = vpop.f32.mrf.mxu0
    %v533 = vadd.f32 %v510, %v532
    %534 = vdwg.mxu0
    %535 = vst [vmem:[#allocation7] sm:$0xf] %v533
    // Predicated region
    $region54: #{tpu_custom_call.1} parent=1 // pred_check
      _
    $region55: #{tpu_custom_call.1} parent=1 // pred_check_branch
      %537 = sbr.rel (0) target = $region57
    $region56: #{tpu_custom_call.1} parent=1 // pred_region
      %539 = vsyncadd [#allocation4], 0
      %s541 = sshll.u32 [#allocation7], 4
      %s542 = int_to_ptr.vmem [resolvable:$true] %s541
      %s543 = sshll.u32 %s11, 4
      %s544 = int_to_ptr.hbm [resolvable:$true] %s543
      %546 = dma.vmem_to_hbm [thread:$0]  %s542, 64, %s544, [#allocation4]
    $region57: #{tpu_custom_call.1} parent=1 // pred_fallthru
      _
    // Predicated region
    $region58: #{tpu_custom_call.1} parent=1 // pred_check
      _
    $region59: #{tpu_custom_call.1} parent=1 // pred_check_branch
      %548 = sbr.rel (0) target = $region61
    $region60: #{tpu_custom_call.1} parent=1 // pred_region
      %550 = dma.done [#allocation4], 64
    $region61: #{tpu_custom_call.1} parent=1 // pred_fallthru
      _
    %551 = vsyncpa [#allocation3], 1
    %552 = vsyncpa [#allocation6], 1
    %553 = vsyncpa [#allocation4], 1

</llo_original>
